<compile_context>
chip_gen: v6e
topology: v6e:2x2x1
jax: 0.10.0
libtpu: 0.0.40
codegen_flags: <defaults>
</compile_context>

<pallas_src>
import functools
import numpy as np
import jax
import jax.numpy as jnp
from jax.experimental import pallas as pl
from jax.experimental.pallas import tpu as pltpu

RMS_EPS = 1e-6


# ---------------------- target-aware VMEM budgeting --------------------------
def _tpu_vmem_bytes():
    try:
        return int(pltpu.get_tpu_info().vmem_capacity_bytes)
    except Exception:
        return 128 * 1024 * 1024


_PHYS_VMEM = _tpu_vmem_bytes()
# Scoped limit: half of physical (32 MiB on v7x, 64 MiB on v5e/v6e).
VMEM_LIMIT = min(_PHYS_VMEM // 2, 64 * 1024 * 1024)


def _round_up(x, a):
    return ((x + a - 1) // a) * a


def _rms_row_tile(m, c, in_itemsize, out_itemsize):
    """Largest row tile such that the double-buffered in+out tiles fit a
    comfortable slice of the scoped VMEM limit."""
    sub = 16 if in_itemsize < 4 else 8            # bf16 packs 16 rows / sublane pair
    # in + out, each double-buffered by the Pallas pipeline => 2x each.
    per_row_bytes = c * (2 * in_itemsize + 2 * out_itemsize)
    budget = min(VMEM_LIMIT // 2, 16 * 1024 * 1024)
    tm = (budget // max(per_row_bytes, 1)) // sub * sub
    tm = max(tm, sub)
    return min(tm, _round_up(m, sub))


# ----------------------------- Pallas kernel ---------------------------------
def _rmsnorm_kernel(x_ref, w_ref, o_ref, *, eps):
    # Reduction in f32 regardless of storage dtype (matches PyTorch reference).
    x = x_ref[...].astype(jnp.float32)
    var = jnp.mean(x * x, axis=-1, keepdims=True)
    xn = x * jax.lax.rsqrt(var + eps)             # rsqrt -> EUP slot
    # PyTorch: cast normalized x back to the INPUT dtype, then multiply by weight.
    xn = xn.astype(x_ref.dtype)
    o_ref[...] = (w_ref[...] * xn).astype(o_ref.dtype)


# ----------------------------- wrapper ----------------------------------------
def rmsnorm(x, weight, eps=RMS_EPS):
    """x: (..., C), weight: (C,). Matches the PyTorch RMSNorm forward."""
    orig_shape = x.shape
    c = orig_shape[-1]
    m = 1
    for s in orig_shape[:-1]:
        m *= int(s)
    x2d = x.reshape(m, c)

    out_dtype = jnp.promote_types(x.dtype, weight.dtype)
    in_bytes = jnp.dtype(x.dtype).itemsize
    out_bytes = jnp.dtype(out_dtype).itemsize

    tm = _rms_row_tile(m, c, in_bytes, out_bytes)
    m_pad = _round_up(m, tm)
    if m_pad != m:
        # Zero rows normalize to finite values (rsqrt(eps)); sliced off below.
        x2d = jnp.pad(x2d, ((0, m_pad - m), (0, 0)))
    grid = (m_pad // tm,)

    cost = pl.CostEstimate(
        flops=4 * m * c,
        transcendentals=m,
        bytes_accessed=m * c * (in_bytes + out_bytes)
        + c * jnp.dtype(weight.dtype).itemsize,
    )

    out = pl.pallas_call(
        functools.partial(_rmsnorm_kernel, eps=eps),
        out_shape=jax.ShapeDtypeStruct((m_pad, c), out_dtype),
        grid=grid,
        in_specs=[pl.BlockSpec((tm, c), lambda i: (i, 0)),
                  pl.BlockSpec((1, c), lambda i: (0, 0))],
        out_specs=pl.BlockSpec((tm, c), lambda i: (i, 0)),
        compiler_params=pltpu.CompilerParams(
            dimension_semantics=("parallel",),
            vmem_limit_bytes=VMEM_LIMIT),
        cost_estimate=cost,
    )(x2d, weight.reshape(1, c))

    if m_pad != m:
        out = out[:m]
    return out.reshape(orig_shape[:-1] + (c,))


# ----------------------------- pure-JAX reference ----------------------------
def ref_rmsnorm(x, weight, eps=RMS_EPS):
    input_dtype = x.dtype
    xf = x.astype(jnp.float32)
    var = jnp.mean(xf * xf, axis=-1, keepdims=True)
    xn = (xf * jax.lax.rsqrt(var + eps)).astype(input_dtype)
    return weight * xn


# ----------------------------- main ------------------------------------------
if __name__ == "__main__":
    key = jax.random.PRNGKey(0)
    k1, k2, k3 = jax.random.split(key, 3)

    n_embed = 256
    weight = 1.0 + 0.05 * jax.random.normal(k1, (n_embed,), dtype=jnp.float32)

    # Case 1: f32 activations, divisible row count  (B=2, T=8, C=256 -> M=16)
    x_f32 = jax.random.normal(k2, (2, 8, n_embed), dtype=jnp.float32)
    y_f32 = jax.block_until_ready(jax.jit(rmsnorm)(x_f32, weight))
    np.testing.assert_allclose(np.asarray(y_f32),
                               np.asarray(ref_rmsnorm(x_f32, weight)),
                               rtol=1e-5, atol=1e-5)

    # Case 2: bf16 activations, non-divisible row count (B=3, T=5 -> M=15, padded)
    x_bf16 = jax.random.normal(k3, (3, 5, n_embed), dtype=jnp.float32).astype(jnp.bfloat16)
    y_bf16 = jax.block_until_ready(jax.jit(rmsnorm)(x_bf16, weight))
    np.testing.assert_allclose(np.asarray(y_bf16, dtype=np.float32),
                               np.asarray(ref_rmsnorm(x_bf16, weight), dtype=np.float32),
                               rtol=2e-2, atol=2e-2)

    print("KERNEL_OK")
</pallas_src>

<mosaic_0001>
module attributes {stable_mosaic.version = 11 : i64} {
  func.func @_rmsnorm_kernel(%arg0: i32, %arg1: memref<16x256xf32, #tpu.memory_space<vmem>>, %arg2: memref<1x256xf32, #tpu.memory_space<vmem>>, %arg3: memref<16x256xf32, #tpu.memory_space<vmem>>) attributes {dimension_semantics = [#tpu.dimension_semantics<parallel>], iteration_bounds = array<i64: 1>, scalar_prefetch = 0 : i64, scratch_operands = 0 : i64, tpu.core_type = #tpu.core_type<tc>, window_params = [{transform_indices = @transform_0, window_bounds = array<i64: 16, 256>}, {pipeline_mode = #tpu.pipeline_mode<synchronous>, transform_indices = @transform_1, window_bounds = array<i64: 1, 256>}, {transform_indices = @transform_2, window_bounds = array<i64: 16, 256>}]} {
    %c0 = arith.constant 0 : index
    %c0_0 = arith.constant 0 : index
    %0 = vector.load %arg1[%c0, %c0_0] : memref<16x256xf32, #tpu.memory_space<vmem>>, vector<16x256xf32>
    %1 = arith.mulf %0, %0 : vector<16x256xf32>
    %cst = arith.constant dense<0.000000e+00> : vector<16xf32>
    %2 = vector.multi_reduction <add>, %1, %cst [1] : vector<16x256xf32> to vector<16xf32>
    %3 = vector.shape_cast %2 : vector<16xf32> to vector<16x1xf32>
    %cst_1 = arith.constant 2.560000e+02 : f32
    %4 = vector.broadcast %cst_1 : f32 to vector<16x1xf32>
    %5 = arith.divf %3, %4 : vector<16x1xf32>
    %cst_2 = arith.constant 9.99999997E-7 : f32
    %6 = vector.broadcast %cst_2 : f32 to vector<16x1xf32>
    %7 = arith.addf %5, %6 : vector<16x1xf32>
    %8 = math.rsqrt %7 : vector<16x1xf32>
    %9 = vector.broadcast %8 : vector<16x1xf32> to vector<16x256xf32>
    %10 = arith.mulf %0, %9 : vector<16x256xf32>
    %c0_3 = arith.constant 0 : index
    %c0_4 = arith.constant 0 : index
    %11 = vector.load %arg2[%c0_3, %c0_4] : memref<1x256xf32, #tpu.memory_space<vmem>>, vector<1x256xf32>
    %12 = vector.broadcast %11 : vector<1x256xf32> to vector<16x256xf32>
    %13 = arith.mulf %12, %10 : vector<16x256xf32>
    %c0_5 = arith.constant 0 : index
    %c0_6 = arith.constant 0 : index
    %14 = vector.load %arg3[%c0_5, %c0_6] : memref<16x256xf32, #tpu.memory_space<vmem>>, vector<16x256xf32>
    tpu.vector_store %arg3[%c0_5, %c0_6], %13 {strides = array<i32>} : memref<16x256xf32, #tpu.memory_space<vmem>>, vector<16x256xf32>,
    return
  }
  func.func @transform_0(%arg0: i32) -> (i32, i32) {
    %c0_i32 = arith.constant 0 : i32
    %c0_i32_0 = arith.constant 0 : i32
    return %arg0, %c0_i32 : i32, i32
  }
  func.func @transform_1(%arg0: i32) -> (i32, i32) {
    %c0_i32 = arith.constant 0 : i32
    %c0_i32_0 = arith.constant 0 : i32
    %c0_i32_1 = arith.constant 0 : i32
    return %c0_i32, %c0_i32_0 : i32, i32
  }
  func.func @transform_2(%arg0: i32) -> (i32, i32) {
    %c0_i32 = arith.constant 0 : i32
    %c0_i32_0 = arith.constant 0 : i32
    return %arg0, %c0_i32 : i32, i32
  }
}

</mosaic_0001>

<llo_original>
// kernel: rmsnorm.1
$region0: #{rmsnorm.1}
  #allocation0 [shape = 'u32[]', space=smem, size = 0x4, offset = 0x4, fixed_abs, tag = 'smem constant byte address 0x4 - core index']
  #allocation1 [shape = 'u32[144,128]{1,0:T(1,128)}', space=vmem, size = 0x12000, scoped, tag = 'internal scratch']
  %s0 = inlined_call_operand.hbm [shape: f32[16,256], index: 0, kind: input, shape index: {}]
  %s1 = inlined_call_operand.vmem [shape: f32[1,256], index: 1, kind: input, shape index: {}]
  %s2 = inlined_call_operand.hbm [shape: f32[16,256], index: 2, kind: output, shape index: {}]
  %s3 = sld [smem:[#allocation0]]
  $region22: #{rmsnorm.1} parent=0
    _
  %s5 = ssub.s32 1, %s3
  %s6 = scalar_select 0, %s5, %s3
  $region1: #{rmsnorm.1} parent=0
    #allocation2 [shape = 'u8[16384]{0}', space=vmem, size = 0x4000, scoped, tag = 'input window, operand 0, single buffered']
    #allocation3 [shape = 's32[1]{0}', space=sflag, size = 0x4, scoped, tag = 'scoped memory for rmsnorm.1']
    #allocation4 [shape = 's32[1]{0}', space=sflag, size = 0x4, scoped, tag = 'scoped memory for rmsnorm.1']
    #allocation5 [shape = 'u8[16384]{0}', space=vmem, size = 0x4000, scoped, tag = 'output window, operand 0, single buffered']
    %7 = vsyncpa [#allocation3], 0
    %8 = vsyncpa [#allocation4], 0
    // Predicated region
    $region2: #{rmsnorm.1} parent=1 // pred_check
      _
    $region3: #{rmsnorm.1} parent=1 // pred_check_branch
      %10 = sbr.rel (0) target = $region5
    $region4: #{rmsnorm.1} parent=1 // pred_region
      %s12 = ssub.s32 512, 512
      %13 = vsyncadd [#allocation3], %s12
      %s14 = sshll.u32 [#allocation2], 4
      %s15 = int_to_ptr.vmem [resolvable:$true] %s14
      %20 = dma.hbm_to_vmem [thread:$0]  %s0, 512, %s15, [#allocation3], 256, 256, 16
    $region5: #{rmsnorm.1} parent=1 // pred_fallthru
      _
    // Predicated region
    $region6: #{rmsnorm.1} parent=1 // pred_check
      _
    $region7: #{rmsnorm.1} parent=1 // pred_check_branch
      %22 = sbr.rel (0) target = $region9
    $region8: #{rmsnorm.1} parent=1 // pred_region
      _
    $region9: #{rmsnorm.1} parent=1 // pred_fallthru
      _
    // Predicated region
    $region10: #{rmsnorm.1} parent=1 // pred_check
      _
    $region11: #{rmsnorm.1} parent=1 // pred_check_branch
      %24 = sbr.rel (0) target = $region13
    $region12: #{rmsnorm.1} parent=1 // pred_region
      %25 = dma.done [#allocation3], 512
    $region13: #{rmsnorm.1} parent=1 // pred_fallthru
      _
    %v26 = vld [vmem:[#allocation2] sm:$0xff]
    %v27 = vld [vmem:[#allocation2 + $0x8] sm:$0xff]
    %v28 = vld [vmem:[#allocation2 + $0x10] sm:$0xff]
    %v29 = vld [vmem:[#allocation2 + $0x18] sm:$0xff]
    %v30 = vmul.f32 %v26, %v26
    %v31 = vmul.f32 %v27, %v27
    %v32 = vmul.f32 %v28, %v28
    %v33 = vmul.f32 %v29, %v29
    %v34 = vadd.f32 %v30, %v31
    %35 = vadd.xlane.f32.xlu0 %v34
    %v36 = vpop.xlane.xlu0 %35
    %v37 = vadd.f32 %v32, %v33
    %38 = vadd.xlane.f32.xlu0 %v37
    %v39 = vpop.xlane.xlu0 %38
    %v40 = vrcp.pop 256.0
    %v41 = vmul.f32 %v36, %v40
    %v42 = vmul.f32 %v39, %v40
    %v43 = vadd.f32 %v41, 1e-06
    %v44 = vadd.f32 %v42, 1e-06
    %v45 = vrsqrt.pop %v43
    %v46 = vrsqrt.pop %v44
    %v47 = vmul.f32 %v26, %v45
    %v48 = vmul.f32 %v27, %v45
    %v49 = vmul.f32 %v28, %v46
    %v50 = vmul.f32 %v29, %v46
    %v51 = vld [vmem:[%s1] sm:$0x3]
    %v53 = vlaneseq
    %v54 = vshrl.u32 %v53, 7
    %v55 = vsub.s32 0, %v54
    %v56 = vrot.slane %v51, %v55
    %v57 = vlaneseq
    %v58 = vshrl.u32 %v57, 7
    %v59 = vsub.s32 1, %v58
    %v60 = vrot.slane %v51, %v59
    %v63 = vmul.f32 %v56, %v47
    %v64 = vmul.f32 %v60, %v48
    %v65 = vmul.f32 %v56, %v49
    %v66 = vmul.f32 %v60, %v50
    %67 = vst [vmem:[#allocation5] sm:$0xff] %v63
    %68 = vst [vmem:[#allocation5 + $0x8] sm:$0xff] %v64
    %69 = vst [vmem:[#allocation5 + $0x10] sm:$0xff] %v65
    %70 = vst [vmem:[#allocation5 + $0x18] sm:$0xff] %v66
    // Predicated region
    $region14: #{rmsnorm.1} parent=1 // pred_check
      _
    $region15: #{rmsnorm.1} parent=1 // pred_check_branch
      %72 = sbr.rel (0) target = $region17
    $region16: #{rmsnorm.1} parent=1 // pred_region
      %s74 = ssub.s32 512, 512
      %75 = vsyncadd [#allocation4], %s74
      %s76 = sshll.u32 [#allocation5], 4
      %s77 = int_to_ptr.vmem [resolvable:$true] %s76
      %82 = dma.vmem_to_hbm [thread:$0]  %s77, 512, %s2, [#allocation4], 256, 256, 16
    $region17: #{rmsnorm.1} parent=1 // pred_fallthru
      _
    // Predicated region
    $region18: #{rmsnorm.1} parent=1 // pred_check
      _
    $region19: #{rmsnorm.1} parent=1 // pred_check_branch
      %84 = sbr.rel (0) target = $region21
    $region20: #{rmsnorm.1} parent=1 // pred_region
      %85 = dma.done [#allocation4], 512
    $region21: #{rmsnorm.1} parent=1 // pred_fallthru
      _
    %86 = vsyncpa [#allocation3], 1
    %87 = vsyncpa [#allocation4], 1

</llo_original>
